<compile_context>
chip_gen: v6e
topology: v6e:2x2x1
jax: 0.10.0
libtpu: 0.0.40
codegen_flags: <defaults>
</compile_context>

<pallas_src>
import jax
import jax.numpy as jnp
from jax.experimental import pallas as pl
from jax.experimental.pallas import tpu as pltpu

_LANE = 128
# Below this total size, pallas_call dispatch + pipeline prologue costs more
# than the XLA-fused elementwise op.
_MIN_PALLAS_BYTES = 512 * 1024


def _sine_kernel(x_ref, o_ref):
    # VPU multiply + polynomial sin (range-reduction on the vector ALUs).
    o_ref[...] = jnp.sin(30.0 * x_ref[...])


def _chip_config():
    """Per-generation tiling knobs, conservative fallback for unknown parts."""
    kind = ""
    try:
        kind = jax.devices()[0].device_kind.lower()
    except Exception:
        pass
    if "v7" in kind:
        # ~3.2 TB/s HBM: 8 MiB blocks keep the ~0.35us/step overhead <10%.
        # in+out x double-buffer = 32 MiB -> raise scoped VMEM limit
        # (physical VMEM is 64 MiB per TC).
        return {"block_bytes": 8 << 20, "vmem_limit": 48 << 20, "two_tc": True}
    if "v6" in kind:
        # ~1.3-1.4 TB/s HBM: 4 MiB blocks; raise the limit for headroom
        # (physical VMEM is 128 MiB).
        return {"block_bytes": 4 << 20, "vmem_limit": 64 << 20, "two_tc": False}
    # v5e & unknown: 2 MiB blocks (4 x 2 MiB fits v5e's 16 MiB scoped default).
    return {"block_bytes": 2 << 20, "vmem_limit": None, "two_tc": False}


def _choose_cols(n: int, sublane_mult: int):
    """Largest lane-dense width (multiple of 128) dividing n, preferring one
    that leaves at least a full packed sublane group of rows. None otherwise."""
    for c in (4096, 2048, 1024, 512, 256, 128):
        if n % c == 0 and (n // c) >= sublane_mult:
            return c
    for c in (4096, 2048, 1024, 512, 256, 128):
        if n % c == 0:
            return c
    return None


def _run(x2: jax.Array, tr: int, grid: int, vmem_limit) -> jax.Array:
    rows, cols = x2.shape
    n = rows * cols
    itemsize = jnp.dtype(x2.dtype).itemsize
    params = {"dimension_semantics": ("parallel",)}
    if vmem_limit is not None:
        params["vmem_limit_bytes"] = vmem_limit
    return pl.pallas_call(
        _sine_kernel,
        out_shape=jax.ShapeDtypeStruct((rows, cols), x2.dtype),
        grid_spec=pltpu.PrefetchScalarGridSpec(
            num_scalar_prefetch=0,
            grid=(grid,),
            in_specs=[pl.BlockSpec((tr, cols), lambda i: (i, 0))],
            out_specs=pl.BlockSpec((tr, cols), lambda i: (i, 0)),
        ),
        compiler_params=pltpu.CompilerParams(**params),
        cost_estimate=pl.CostEstimate(
            flops=n,
            transcendentals=n,
            bytes_accessed=2 * n * itemsize,
        ),
    )(x2)


def sine(x: jax.Array, *, min_pallas_bytes: int = _MIN_PALLAS_BYTES) -> jax.Array:
    """Elementwise sin(30 * x), matching torch.sin(30 * input)."""
    orig_shape = x.shape
    n = x.size
    itemsize = jnp.dtype(x.dtype).itemsize

    # Tiny (or empty) tensors: XLA-fused elementwise beats kernel dispatch.
    if n == 0 or n * itemsize < min_pallas_bytes:
        return jnp.sin(30.0 * x)

    cfg = _chip_config()
    # Packed sublane multiple: 8 for 32-bit, 16 for bf16, 32 for int8.
    sublane_mult = 8 * max(1, 4 // itemsize)

    flat = x.reshape(-1)
    cols = _choose_cols(n, sublane_mult)

    tail = None
    if cols is None:
        # Ragged element count: kernel handles the 128-aligned prefix, the
        # (<128-element) tail is computed in plain JAX. Avoids the pad + slice
        # full-tensor copies of a padding approach.
        cols = _LANE
        n_main = (n // _LANE) * _LANE
        if n_main == 0:
            return jnp.sin(30.0 * x)
        tail = flat[n_main:]
        flat = flat[:n_main]

    rows = flat.size // cols
    x2 = flat.reshape(rows, cols)

    # Row tile sized to the per-chip block target, rounded to sublane packing.
    tr_cap = (cfg["block_bytes"] // (cols * itemsize)) // sublane_mult * sublane_mult
    tr_cap = max(tr_cap, sublane_mult)
    if rows > tr_cap:
        tr = tr_cap  # ragged final block (if any) is masked by Pallas
    else:
        tr = rows  # full-extent block (no divisibility constraint)
        # Only split a single-block tensor when there are two TensorCores to
        # shard across AND each half block still amortizes the step overhead.
        if (cfg["two_tc"]
                and rows % (2 * sublane_mult) == 0
                and (rows // 2) * cols * itemsize >= (1 << 20)):
            tr = rows // 2
    grid = pl.cdiv(rows, tr)

    out = _run(x2, tr, grid, cfg["vmem_limit"]).reshape(-1)
    if tail is not None:
        out = jnp.concatenate([out, jnp.sin(30.0 * tail)])
    return out.reshape(orig_shape)


if __name__ == "__main__":
    key = jax.random.PRNGKey(0)

    # Small NCHW input consistent with the conv-autoencoder usage.
    x = jax.random.normal(key, (2, 4, 16, 16), dtype=jnp.float32)

    # 1) Default path (tiny tensor -> fused jnp fallback).
    y = jax.block_until_ready(sine(x))
    ref = jnp.sin(30.0 * x)
    assert y.shape == x.shape and y.dtype == x.dtype
    assert jnp.allclose(y, ref, atol=1e-5, rtol=1e-5)

    # 2) Force the Pallas kernel on the same (lane-aligned) input.
    y_k = jax.block_until_ready(sine(x, min_pallas_bytes=0))
    assert jnp.allclose(y_k, ref, atol=1e-5, rtol=1e-5)

    # 3) Force the Pallas kernel on a ragged (non-multiple-of-128) input to
    #    exercise the aligned-prefix + jnp-tail path.
    x_r = jax.random.normal(jax.random.PRNGKey(0), (2, 3, 17, 17), dtype=jnp.float32)
    y_r = jax.block_until_ready(sine(x_r, min_pallas_bytes=0))
    assert jnp.allclose(y_r, jnp.sin(30.0 * x_r), atol=1e-5, rtol=1e-5)

    print("KERNEL_OK")
</pallas_src>

<mosaic_0001>
module attributes {stable_mosaic.version = 11 : i64} {
  func.func @_sine_kernel(%arg0: i32, %arg1: memref<8x256xf32, #tpu.memory_space<vmem>>, %arg2: memref<8x256xf32, #tpu.memory_space<vmem>>) attributes {dimension_semantics = [#tpu.dimension_semantics<parallel>], iteration_bounds = array<i64: 1>, scalar_prefetch = 0 : i64, scratch_operands = 0 : i64, tpu.core_type = #tpu.core_type<tc>, window_params = [{transform_indices = @transform_0, window_bounds = array<i64: 8, 256>}, {transform_indices = @transform_1, window_bounds = array<i64: 8, 256>}]} {
    %c0 = arith.constant 0 : index
    %c0_0 = arith.constant 0 : index
    %0 = vector.load %arg1[%c0, %c0_0] : memref<8x256xf32, #tpu.memory_space<vmem>>, vector<8x256xf32>
    %cst = arith.constant 3.000000e+01 : f32
    %1 = vector.broadcast %cst : f32 to vector<8x256xf32>
    %2 = arith.mulf %1, %0 : vector<8x256xf32>
    %3 = math.sin %2 : vector<8x256xf32>
    %c0_1 = arith.constant 0 : index
    %c0_2 = arith.constant 0 : index
    %4 = vector.load %arg2[%c0_1, %c0_2] : memref<8x256xf32, #tpu.memory_space<vmem>>, vector<8x256xf32>
    tpu.vector_store %arg2[%c0_1, %c0_2], %3 {strides = array<i32>} : memref<8x256xf32, #tpu.memory_space<vmem>>, vector<8x256xf32>,
    return
  }
  func.func @transform_0(%arg0: i32) -> (i32, i32) {
    %c0_i32 = arith.constant 0 : i32
    %c0_i32_0 = arith.constant 0 : i32
    return %arg0, %c0_i32 : i32, i32
  }
  func.func @transform_1(%arg0: i32) -> (i32, i32) {
    %c0_i32 = arith.constant 0 : i32
    %c0_i32_0 = arith.constant 0 : i32
    return %arg0, %c0_i32 : i32, i32
  }
}

</mosaic_0001>

<llo_original>
// kernel: tpu_custom_call.1
$region0: #{tpu_custom_call.1}
  #allocation0 [shape = 'u32[]', space=smem, size = 0x4, offset = 0x4, fixed_abs, tag = 'smem constant byte address 0x4 - core index']
  #allocation1 [shape = 'u32[144,128]{1,0:T(1,128)}', space=vmem, size = 0x12000, scoped, tag = 'internal scratch']
  %s0 = inlined_call_operand.hbm [shape: f32[8,256], index: 0, kind: input, shape index: {}]
  %s1 = inlined_call_operand.hbm [shape: f32[8,256], index: 1, kind: output, shape index: {}]
  %s2 = sld [smem:[#allocation0]]
  $region18: #{tpu_custom_call.1} parent=0
    _
  %s4 = ssub.s32 1, %s2
  %s5 = scalar_select 0, %s4, %s2
  $region1: #{tpu_custom_call.1} parent=0
    #allocation2 [shape = 'u8[8192]{0}', space=vmem, size = 0x2000, scoped, tag = 'input window, operand 0, single buffered']
    #allocation3 [shape = 's32[1]{0}', space=sflag, size = 0x4, scoped, tag = 'scoped memory for tpu_custom_call.1']
    #allocation4 [shape = 's32[1]{0}', space=sflag, size = 0x4, scoped, tag = 'scoped memory for tpu_custom_call.1']
    #allocation5 [shape = 'u8[8192]{0}', space=vmem, size = 0x2000, scoped, tag = 'output window, operand 0, single buffered']
    %6 = vsyncpa [#allocation3], 0
    %7 = vsyncpa [#allocation4], 0
    // Predicated region
    $region2: #{tpu_custom_call.1} parent=1 // pred_check
      _
    $region3: #{tpu_custom_call.1} parent=1 // pred_check_branch
      %9 = sbr.rel (0) target = $region5
    $region4: #{tpu_custom_call.1} parent=1 // pred_region
      %s11 = ssub.s32 256, 256
      %12 = vsyncadd [#allocation3], %s11
      %s14 = sshll.u32 [#allocation2], 4
      %s15 = int_to_ptr.vmem [resolvable:$true] %s14
      %17 = dma.hbm_to_vmem [thread:$0]  %s0, 256, %s15, [#allocation3]
    $region5: #{tpu_custom_call.1} parent=1 // pred_fallthru
      _
    // Predicated region
    $region6: #{tpu_custom_call.1} parent=1 // pred_check
      _
    $region7: #{tpu_custom_call.1} parent=1 // pred_check_branch
      %19 = sbr.rel (0) target = $region9
    $region8: #{tpu_custom_call.1} parent=1 // pred_region
      %20 = dma.done [#allocation3], 256
    $region9: #{tpu_custom_call.1} parent=1 // pred_fallthru
      _
    %v21 = vld [vmem:[#allocation2] sm:$0xff]
    %v22 = vld [vmem:[#allocation2 + $0x8] sm:$0xff]
    %v23 = vmul.f32 %v21, 30.0
    %v24 = vmul.f32 %v22, 30.0
    %v25 = vand.u32 2147483647, %v23
    %vm26 = vcmp.le.f32.partialorder %v25, 0.7853982
    %vm27 = vcmp.lt.s32.totalorder %v23, 0
    %v28 = vand.u32 %v23, 2139095040
    %v29 = vshrl.u32 %v28, 23
    %v30 = vsub.s32 %v29, 127
    %v31 = vand.u32 2147483647, %v23
    %v32 = vand.u32 %v31, 8388607
    %v33 = vor.u32 %v32, 8388608
    %v34 = vsub.s32 0, %v33
    %v35 = vadd.s32 %v30, 1
    %vm36 = vcmp.gt.s32.totalorder %v35, 0
    %v37 = vsel %vm36, %v35, 0
    %v38 = vshrl.u32 %v37, 5
    %v39 = vand.u32 %v37, 31
    %v40 = vsub.s32 32, %v39
    %v41 = vshrl.u32 683565275, %v40
    %v42 = vshll.u32 683565275, %v39
    %v43 = vshrl.u32 2475754826, %v40
    %v44 = vor.u32 %v42, %v43
    %v45 = vshll.u32 2475754826, %v39
    %v46 = vshrl.u32 2131351028, %v40
    %v47 = vor.u32 %v45, %v46
    %v48 = vshll.u32 2131351028, %v39
    %v49 = vshrl.u32 2102212464, %v40
    %v50 = vor.u32 %v48, %v49
    %v51 = vshll.u32 2102212464, %v39
    %v52 = vshrl.u32 920167782, %v40
    %v53 = vor.u32 %v51, %v52
    %v54 = vshll.u32 920167782, %v39
    %v55 = vshrl.u32 1326507024, %v40
    %v56 = vor.u32 %v54, %v55
    %vm57 = vcmp.lt.s32.totalorder %v38, 1
    %vm58 = vcmp.lt.s32.totalorder %v38, 2
    %vm59 = vcmp.lt.s32.totalorder %v38, 3
    %vm60 = vcmp.lt.s32.totalorder %v38, 4
    %v61 = vsel %vm57, %v41, %v44
    %v62 = vsel %vm60, %v50, 2102212464
    %v63 = vsel %vm59, %v47, %v62
    %v64 = vsel %vm58, %v61, %v63
    %v65 = vsel %vm57, %v44, %v47
    %v66 = vsel %vm60, %v53, 920167782
    %v67 = vsel %vm59, %v50, %v66
    %v68 = vsel %vm58, %v65, %v67
    %v69 = vsel %vm57, %v47, %v50
    %v70 = vsel %vm60, %v56, 1326507024
    %v71 = vsel %vm59, %v53, %v70
    %v72 = vsel %vm58, %v69, %v71
    %v73 = vshll.u32 %v33, 8
    %v74 = vmul.u32.u64.compose %v73, %v72
    %v75 = vextract.low.u32 %v74
    %v76 = vextract.high.u32 %v74
    %v77 = vmul.u32.u64.compose %v73, %v68
    %v78 = vextract.low.u32 %v77
    %v79 = vextract.high.u32 %v77
    %v80 = vmul.u32 %v73, %v64
    %v81 = vadd.s32 %v76, %v78
    %vm82 = vc.u32 %v76, %v78
    %v83 = vadd.s32 %v79, 1
    %v84 = vsel %vm82, %v83, %v79
    %v85 = vadd.s32 %v80, %v84
    %v86 = vadd.s32 %v85, 536870912
    %v87 = vshrl.u32 %v86, 30
    %v88 = vshll.u32 %v87, 30
    %v89 = vsub.s32 %v85, %v88
    %vm90 = vcmp.lt.s32.totalorder %v89, 0
    %v91 = vsub.s32 0, %v89
    %v92 = vsel %vm90, %v91, %v89
    %v93 = vclz %v92
    %v94 = vsub.s32 %v93, 2
    %vm95 = vcmp.gt.s32.totalorder 0, %v94
    %v96 = vsel %vm95, 0, %v94
    %v97 = vsub.s32 32, %v96
    %v98 = vshll.u32 %v89, %v96
    %v99 = vshrl.u32 %v81, %v97
    %v100 = vor.u32 %v98, %v99
    %v101 = vsub.s32 4294967266, %v96
    %v102 = vadd.s32 %v101, 127
    %v103 = vshll.u32 %v102, 23
    %v104 = vor.u32 4788187, %v103
    %v105 = vand.u32 2147483647, %v104
    %v107 = vcvt.s32.f32 %v100
    %v108 = vmul.f32 %v107, %v105
    %v109 = vxor.u32 %v108, 2147483648
    %v110 = vsel %vm27, %v109, %v108
    %v111 = vsub.s32 4, %v87
    %v112 = vsel %vm27, %v111, %v87
    %v113 = vsel %vm26, %v23, %v110
    %v114 = vsel %vm26, 0, %v112
    %v115 = vcosq.f32.pop %v113
    %v116 = vsinq.f32.pop %v113
    %vm117 = vweird.f32 %v23
    %v118 = vadd.s32 %v114, 3
    %v119 = vand.u32 %v118, 3
    %vm120 = vcmp.lt.s32.totalorder %v119, 2
    %vm121 = vcmp.eq.s32.totalorder %v119, 0
    %v122 = vxor.u32 %v116, 2147483648
    %v123 = vsel %vm121, %v115, %v122
    %vm124 = vcmp.eq.s32.totalorder %v119, 2
    %v125 = vxor.u32 %v115, 2147483648
    %v126 = vsel %vm124, %v125, %v116
    %v127 = vsel %vm120, %v123, %v126
    %v128 = vsel %vm117, nan, %v127
    %v129 = vand.u32 2147483647, %v24
    %vm130 = vcmp.le.f32.partialorder %v129, 0.7853982
    %vm131 = vcmp.lt.s32.totalorder %v24, 0
    %v132 = vand.u32 %v24, 2139095040
    %v133 = vshrl.u32 %v132, 23
    %v134 = vsub.s32 %v133, 127
    %v135 = vand.u32 2147483647, %v24
    %v136 = vand.u32 %v135, 8388607
    %v137 = vor.u32 %v136, 8388608
    %v138 = vsub.s32 0, %v137
    %v139 = vadd.s32 %v134, 1
    %vm140 = vcmp.gt.s32.totalorder %v139, 0
    %v141 = vsel %vm140, %v139, 0
    %v142 = vshrl.u32 %v141, 5
    %v143 = vand.u32 %v141, 31
    %v144 = vsub.s32 32, %v143
    %v145 = vshrl.u32 683565275, %v144
    %v146 = vshll.u32 683565275, %v143
    %v147 = vshrl.u32 2475754826, %v144
    %v148 = vor.u32 %v146, %v147
    %v149 = vshll.u32 2475754826, %v143
    %v150 = vshrl.u32 2131351028, %v144
    %v151 = vor.u32 %v149, %v150
    %v152 = vshll.u32 2131351028, %v143
    %v153 = vshrl.u32 2102212464, %v144
    %v154 = vor.u32 %v152, %v153
    %v155 = vshll.u32 2102212464, %v143
    %v156 = vshrl.u32 920167782, %v144
    %v157 = vor.u32 %v155, %v156
    %v158 = vshll.u32 920167782, %v143
    %v159 = vshrl.u32 1326507024, %v144
    %v160 = vor.u32 %v158, %v159
    %vm161 = vcmp.lt.s32.totalorder %v142, 1
    %vm162 = vcmp.lt.s32.totalorder %v142, 2
    %vm163 = vcmp.lt.s32.totalorder %v142, 3
    %vm164 = vcmp.lt.s32.totalorder %v142, 4
    %v165 = vsel %vm161, %v145, %v148
    %v166 = vsel %vm164, %v154, 2102212464
    %v167 = vsel %vm163, %v151, %v166
    %v168 = vsel %vm162, %v165, %v167
    %v169 = vsel %vm161, %v148, %v151
    %v170 = vsel %vm164, %v157, 920167782
    %v171 = vsel %vm163, %v154, %v170
    %v172 = vsel %vm162, %v169, %v171
    %v173 = vsel %vm161, %v151, %v154
    %v174 = vsel %vm164, %v160, 1326507024
    %v175 = vsel %vm163, %v157, %v174
    %v176 = vsel %vm162, %v173, %v175
    %v177 = vshll.u32 %v137, 8
    %v178 = vmul.u32.u64.compose %v177, %v176
    %v179 = vextract.low.u32 %v178
    %v180 = vextract.high.u32 %v178
    %v181 = vmul.u32.u64.compose %v177, %v172
    %v182 = vextract.low.u32 %v181
    %v183 = vextract.high.u32 %v181
    %v184 = vmul.u32 %v177, %v168
    %v185 = vadd.s32 %v180, %v182
    %vm186 = vc.u32 %v180, %v182
    %v187 = vadd.s32 %v183, 1
    %v188 = vsel %vm186, %v187, %v183
    %v189 = vadd.s32 %v184, %v188
    %v190 = vadd.s32 %v189, 536870912
    %v191 = vshrl.u32 %v190, 30
    %v192 = vshll.u32 %v191, 30
    %v193 = vsub.s32 %v189, %v192
    %vm194 = vcmp.lt.s32.totalorder %v193, 0
    %v195 = vsub.s32 0, %v193
    %v196 = vsel %vm194, %v195, %v193
    %v197 = vclz %v196
    %v198 = vsub.s32 %v197, 2
    %vm199 = vcmp.gt.s32.totalorder 0, %v198
    %v200 = vsel %vm199, 0, %v198
    %v201 = vsub.s32 32, %v200
    %v202 = vshll.u32 %v193, %v200
    %v203 = vshrl.u32 %v185, %v201
    %v204 = vor.u32 %v202, %v203
    %v205 = vsub.s32 4294967266, %v200
    %v206 = vadd.s32 %v205, 127
    %v207 = vshll.u32 %v206, 23
    %v208 = vor.u32 4788187, %v207
    %v209 = vand.u32 2147483647, %v208
    %v211 = vcvt.s32.f32 %v204
    %v212 = vmul.f32 %v211, %v209
    %v213 = vxor.u32 %v212, 2147483648
    %v214 = vsel %vm131, %v213, %v212
    %v215 = vsub.s32 4, %v191
    %v216 = vsel %vm131, %v215, %v191
    %v217 = vsel %vm130, %v24, %v214
    %v218 = vsel %vm130, 0, %v216
    %v219 = vcosq.f32.pop %v217
    %v220 = vsinq.f32.pop %v217
    %vm221 = vweird.f32 %v24
    %v222 = vadd.s32 %v218, 3
    %v223 = vand.u32 %v222, 3
    %vm224 = vcmp.lt.s32.totalorder %v223, 2
    %vm225 = vcmp.eq.s32.totalorder %v223, 0
    %v226 = vxor.u32 %v220, 2147483648
    %v227 = vsel %vm225, %v219, %v226
    %vm228 = vcmp.eq.s32.totalorder %v223, 2
    %v229 = vxor.u32 %v219, 2147483648
    %v230 = vsel %vm228, %v229, %v220
    %v231 = vsel %vm224, %v227, %v230
    %v232 = vsel %vm221, nan, %v231
    %233 = vst [vmem:[#allocation5] sm:$0xff] %v128
    %234 = vst [vmem:[#allocation5 + $0x8] sm:$0xff] %v232
    // Predicated region
    $region10: #{tpu_custom_call.1} parent=1 // pred_check
      _
    $region11: #{tpu_custom_call.1} parent=1 // pred_check_branch
      %236 = sbr.rel (0) target = $region13
    $region12: #{tpu_custom_call.1} parent=1 // pred_region
      %s238 = ssub.s32 256, 256
      %239 = vsyncadd [#allocation4], %s238
      %s241 = sshll.u32 [#allocation5], 4
      %s242 = int_to_ptr.vmem [resolvable:$true] %s241
      %244 = dma.vmem_to_hbm [thread:$0]  %s242, 256, %s1, [#allocation4]
    $region13: #{tpu_custom_call.1} parent=1 // pred_fallthru
      _
    // Predicated region
    $region14: #{tpu_custom_call.1} parent=1 // pred_check
      _
    $region15: #{tpu_custom_call.1} parent=1 // pred_check_branch
      %246 = sbr.rel (0) target = $region17
    $region16: #{tpu_custom_call.1} parent=1 // pred_region
      %247 = dma.done [#allocation4], 256
    $region17: #{tpu_custom_call.1} parent=1 // pred_fallthru
      _
    %248 = vsyncpa [#allocation3], 1
    %249 = vsyncpa [#allocation4], 1

</llo_original>
